<compile_context>
chip_gen: v7x
topology: tpu7x:2x2x1
jax: 0.10.0
libtpu: 0.0.40
codegen_flags: <defaults>
</compile_context>

<pallas_src>
import jax
import jax.numpy as jnp
from jax.experimental import pallas as pl
from jax.experimental.pallas import tpu as pltpu


def _make_kernel(n_valid, ti, tj):
    def kernel(emb_r_ref, emb_c_ref, sq_r_ref, sq_c_ref,
               lab_r_ref, lab_c_ref, out_ref):
        i = pl.program_id(0)
        j = pl.program_id(1)

        @pl.when(j == 0)
        def _init():
            out_ref[...] = jnp.zeros_like(out_ref)

        er = emb_r_ref[...]                      # (TI, Dp), caller dtype
        ec = emb_c_ref[...]                      # (TJ, Dp)

        # Gram block on the MXU, contracting the lane (last) dim of both
        # operands -> no transpose, f32 accumulation.
        gram = jax.lax.dot_general(
            er, ec,
            dimension_numbers=(((1,), (1,)), ((), ())),
            preferred_element_type=jnp.float32)   # (TI, TJ)

        # ||x||^2 terms come pre-computed in both layouts (no in-kernel
        # sublane->lane relayout).
        d2 = jnp.maximum(sq_r_ref[...] + sq_c_ref[...] - 2.0 * gram, 0.0)

        rowg = i * ti + jax.lax.broadcasted_iota(jnp.int32, (ti, tj), 0)
        colg = j * tj + jax.lax.broadcasted_iota(jnp.int32, (ti, tj), 1)
        valid = jnp.logical_and(rowg < n_valid, colg < n_valid)

        same = jnp.logical_and(lab_r_ref[...] == lab_c_ref[...], valid)
        neg = jnp.logical_and(jnp.logical_not(same), valid)

        # Zero the (Gram-trick) diagonal residue so diagonal entries of the
        # "same" mask contribute exactly 0 to the positive-distance sum.
        d2 = jnp.where(rowg == colg, 0.0, d2)
        dist = jnp.sqrt(d2)

        pos_sum = jnp.sum(jnp.where(same, dist, 0.0))
        same_cnt = jnp.sum(jnp.where(same, 1.0, 0.0))
        # softplus(-d) = log(1 + exp(-d)) -- one exp + one log1p per element.
        sp = jnp.log1p(jnp.exp(-dist))
        neg_sum = jnp.sum(jnp.where(neg, sp, 0.0))

        lane = jax.lax.broadcasted_iota(jnp.int32, (1, 1, 128), 2)
        packed = jnp.where(lane == 0, pos_sum,
                 jnp.where(lane == 1, same_cnt,
                 jnp.where(lane == 2, neg_sum, 0.0)))
        out_ref[...] += packed

    return kernel


def pallas_loss(embedding, labels, *, tile=128):
    """embedding: (N, D) float32/bfloat16, labels: (N,) int -> scalar f32."""
    n, d = embedding.shape
    ti = tj = tile
    n_pad = ((n + ti - 1) // ti) * ti
    d_pad = ((d + 127) // 128) * 128

    emb_p = jnp.zeros((n_pad, d_pad), embedding.dtype).at[:n, :d].set(embedding)
    lab = labels.astype(jnp.int32)
    lab_col = jnp.zeros((n_pad, 1), jnp.int32).at[:n, 0].set(lab)
    lab_row = jnp.zeros((1, n_pad), jnp.int32).at[0, :n].set(lab)

    # Row squared norms (O(N*D), trivial vs the O(N^2*D) kernel) in both
    # layouts so the kernel never relayouts a reduction result.
    sq = jnp.sum(emb_p.astype(jnp.float32) ** 2, axis=1)
    sq_col = sq[:, None]                  # (Np, 1)
    sq_row = sq[None, :]                  # (1, Np)

    gi = n_pad // ti
    gj = n_pad // tj

    partials = pl.pallas_call(
        _make_kernel(n, ti, tj),
        out_shape=jax.ShapeDtypeStruct((gi, 1, 128), jnp.float32),
        grid_spec=pltpu.PrefetchScalarGridSpec(
            num_scalar_prefetch=0,
            grid=(gi, gj),
            in_specs=[
                pl.BlockSpec((ti, d_pad), lambda i, j: (i, 0)),   # row emb block
                pl.BlockSpec((tj, d_pad), lambda i, j: (j, 0)),   # col emb block
                pl.BlockSpec((ti, 1), lambda i, j: (i, 0)),       # row |x|^2
                pl.BlockSpec((1, tj), lambda i, j: (0, j)),       # col |x|^2
                pl.BlockSpec((ti, 1), lambda i, j: (i, 0)),       # row labels
                pl.BlockSpec((1, tj), lambda i, j: (0, j)),       # col labels
            ],
            out_specs=pl.BlockSpec((1, 1, 128), lambda i, j: (i, 0, 0)),
        ),
        compiler_params=pltpu.CompilerParams(
            dimension_semantics=("parallel", "arbitrary"),
            vmem_limit_bytes=64 * 1024 * 1024,
        ),
    )(emb_p, emb_p, sq_col, sq_row, lab_col, lab_row)

    pos_sum = jnp.sum(partials[:, 0, 0])
    same_cnt = jnp.sum(partials[:, 0, 1])
    sp_sum = jnp.sum(partials[:, 0, 2])

    n_pos = same_cnt - n            # drop the diagonal from same-label count
    n_neg = float(n) * float(n) - same_cnt
    dist1 = pos_sum / n_pos
    bce = sp_sum / n_neg            # BCEWithLogits(d, 1) = log(1 + exp(-d))
    return 10.0 * bce + dist1


def reference_loss(embedding, labels):
    """Pure-JAX reference mirroring the PyTorch forward."""
    diff = embedding[:, None, :] - embedding[None, :, :]
    dist = jnp.sqrt(jnp.sum(diff * diff, axis=-1))
    same = labels[:, None] == labels[None, :]
    eye = jnp.eye(labels.shape[0], dtype=bool)
    pos = jnp.logical_and(same, jnp.logical_not(eye))
    neg = jnp.logical_not(same)
    dist1 = jnp.sum(dist * pos) / jnp.sum(pos)
    bce = jnp.sum(jnp.log1p(jnp.exp(-dist)) * neg) / jnp.sum(neg)
    return 10.0 * bce + dist1


if __name__ == "__main__":
    key = jax.random.PRNGKey(0)
    N, D = 8, 32
    embedding = jax.random.normal(key, (N, D), dtype=jnp.float32)
    # Deterministic labels guaranteeing both positive and negative pairs.
    labels = jnp.array([0, 0, 1, 1, 2, 2, 3, 3], dtype=jnp.int32)

    loss = pallas_loss(embedding, labels)
    jax.block_until_ready(loss)

    ref = reference_loss(embedding, labels)
    assert jnp.allclose(loss, ref, rtol=1e-4, atol=1e-4), (loss, ref)

    print("KERNEL_OK")
</pallas_src>

<mosaic_0001>
module attributes {stable_mosaic.version = 11 : i64} {
  func.func @kernel(%arg0: i32, %arg1: i32, %arg2: memref<128x128xf32, #tpu.memory_space<vmem>>, %arg3: memref<128x128xf32, #tpu.memory_space<vmem>>, %arg4: memref<128x1xf32, #tpu.memory_space<vmem>>, %arg5: memref<1x128xf32, #tpu.memory_space<vmem>>, %arg6: memref<128x1xi32, #tpu.memory_space<vmem>>, %arg7: memref<1x128xi32, #tpu.memory_space<vmem>>, %arg8: memref<1x1x128xf32, #tpu.memory_space<vmem>>) attributes {dimension_semantics = [#tpu.dimension_semantics<parallel>, #tpu.dimension_semantics<arbitrary>], iteration_bounds = array<i64: 1, 1>, scalar_prefetch = 0 : i64, scratch_operands = 0 : i64, tpu.core_type = #tpu.core_type<tc>, window_params = [{transform_indices = @transform_0, window_bounds = array<i64: 128, 128>}, {transform_indices = @transform_1, window_bounds = array<i64: 128, 128>}, {transform_indices = @transform_2, window_bounds = array<i64: 128, 1>}, {transform_indices = @transform_3, window_bounds = array<i64: 1, 128>}, {transform_indices = @transform_4, window_bounds = array<i64: 128, 1>}, {transform_indices = @transform_5, window_bounds = array<i64: 1, 128>}, {transform_indices = @transform_6, window_bounds = array<i64: 1, 1, 128>}]} {
    %c0_i32 = arith.constant 0 : i32
    %0 = arith.cmpi eq, %arg1, %c0_i32 : i32
    %1 = arith.extui %0 : i1 to i32
    %c0_i32_0 = arith.constant 0 : i32
    %2 = arith.cmpi ne, %1, %c0_i32_0 : i32
    scf.if %2 {
      %cst_34 = arith.constant 0.000000e+00 : f32
      %81 = vector.broadcast %cst_34 : f32 to vector<1x1x128xf32>
      %c0_35 = arith.constant 0 : index
      %c0_36 = arith.constant 0 : index
      %c0_37 = arith.constant 0 : index
      %82 = vector.load %arg8[%c0_35, %c0_36, %c0_37] : memref<1x1x128xf32, #tpu.memory_space<vmem>>, vector<1x1x128xf32>
      tpu.vector_store %arg8[%c0_35, %c0_36, %c0_37], %81 {strides = array<i32>} : memref<1x1x128xf32, #tpu.memory_space<vmem>>, vector<1x1x128xf32>,
    } else {
    }
    %c0 = arith.constant 0 : index
    %c0_1 = arith.constant 0 : index
    %3 = vector.load %arg2[%c0, %c0_1] : memref<128x128xf32, #tpu.memory_space<vmem>>, vector<128x128xf32>
    %c0_2 = arith.constant 0 : index
    %c0_3 = arith.constant 0 : index
    %4 = vector.load %arg3[%c0_2, %c0_3] : memref<128x128xf32, #tpu.memory_space<vmem>>, vector<128x128xf32>
    %cst = arith.constant dense<0.000000e+00> : vector<128x128xf32>
    %5 = tpu.matmul %3, %4, %cst {dimension_numbers = #tpu.dot_dimension_numbers<[1], [1], [0], [0], [0, 0, 1, 0], [], []>} : vector<128x128xf32>, vector<128x128xf32>, vector<128x128xf32> -> vector<128x128xf32>
    %c0_4 = arith.constant 0 : index
    %c0_5 = arith.constant 0 : index
    %6 = vector.load %arg4[%c0_4, %c0_5] : memref<128x1xf32, #tpu.memory_space<vmem>>, vector<128x1xf32>
    %c0_6 = arith.constant 0 : index
    %c0_7 = arith.constant 0 : index
    %7 = vector.load %arg5[%c0_6, %c0_7] : memref<1x128xf32, #tpu.memory_space<vmem>>, vector<1x128xf32>
    %8 = vector.broadcast %6 : vector<128x1xf32> to vector<128x128xf32>
    %9 = vector.broadcast %7 : vector<1x128xf32> to vector<128x128xf32>
    %10 = arith.addf %8, %9 : vector<128x128xf32>
    %cst_8 = arith.constant 2.000000e+00 : f32
    %11 = vector.broadcast %cst_8 : f32 to vector<128x128xf32>
    %12 = arith.mulf %11, %5 : vector<128x128xf32>
    %13 = arith.subf %10, %12 : vector<128x128xf32>
    %cst_9 = arith.constant 0.000000e+00 : f32
    %14 = vector.broadcast %cst_9 : f32 to vector<128x128xf32>
    %15 = arith.maximumf %13, %14 : vector<128x128xf32>
    %c128_i32 = arith.constant 128 : i32
    %16 = arith.muli %arg0, %c128_i32 : i32
    %17 = tpu.iota {dimensions = array<i32: 0>} : vector<128x128xi32>
    %18 = vector.broadcast %16 : i32 to vector<128x128xi32>
    %19 = arith.addi %18, %17 : vector<128x128xi32>
    %c128_i32_10 = arith.constant 128 : i32
    %20 = arith.muli %arg1, %c128_i32_10 : i32
    %21 = tpu.iota {dimensions = array<i32: 1>} : vector<128x128xi32>
    %22 = vector.broadcast %20 : i32 to vector<128x128xi32>
    %23 = arith.addi %22, %21 : vector<128x128xi32>
    %c8_i32 = arith.constant 8 : i32
    %24 = vector.broadcast %c8_i32 : i32 to vector<128x128xi32>
    %25 = arith.cmpi slt, %19, %24 : vector<128x128xi32>
    %c8_i32_11 = arith.constant 8 : i32
    %26 = vector.broadcast %c8_i32_11 : i32 to vector<128x128xi32>
    %27 = arith.cmpi slt, %23, %26 : vector<128x128xi32>
    %28 = arith.andi %25, %27 : vector<128x128xi1>
    %c0_12 = arith.constant 0 : index
    %c0_13 = arith.constant 0 : index
    %29 = vector.load %arg6[%c0_12, %c0_13] : memref<128x1xi32, #tpu.memory_space<vmem>>, vector<128x1xi32>
    %c0_14 = arith.constant 0 : index
    %c0_15 = arith.constant 0 : index
    %30 = vector.load %arg7[%c0_14, %c0_15] : memref<1x128xi32, #tpu.memory_space<vmem>>, vector<1x128xi32>
    %31 = vector.broadcast %29 : vector<128x1xi32> to vector<128x128xi32>
    %32 = vector.broadcast %30 : vector<1x128xi32> to vector<128x128xi32>
    %33 = arith.cmpi eq, %31, %32 : vector<128x128xi32>
    %34 = arith.andi %33, %28 : vector<128x128xi1>
    %cst_16 = arith.constant dense<true> : vector<128x128xi1>
    %35 = arith.xori %34, %cst_16 : vector<128x128xi1>
    %36 = arith.andi %35, %28 : vector<128x128xi1>
    %37 = arith.cmpi eq, %19, %23 : vector<128x128xi32>
    %cst_17 = arith.constant 0.000000e+00 : f32
    %38 = vector.broadcast %cst_17 : f32 to vector<128x128xf32>
    %39 = arith.select %37, %38, %15 : vector<128x128xi1>, vector<128x128xf32>
    %40 = math.sqrt %39 : vector<128x128xf32>
    %cst_18 = arith.constant 0.000000e+00 : f32
    %41 = vector.broadcast %cst_18 : f32 to vector<128x128xf32>
    %42 = arith.select %34, %40, %41 : vector<128x128xi1>, vector<128x128xf32>
    %43 = vector.shape_cast %42 : vector<128x128xf32> to vector<1x128x128xf32>
    %cst_19 = arith.constant dense<0.000000e+00> : vector<1xf32>
    %44 = vector.multi_reduction <add>, %43, %cst_19 [1, 2] : vector<1x128x128xf32> to vector<1xf32>
    %45 = vector.shape_cast %44 : vector<1xf32> to vector<1x1x1xf32>
    %46 = vector.extract %45[0, 0, 0] : f32 from vector<1x1x1xf32>
    %cst_20 = arith.constant 1.000000e+00 : f32
    %cst_21 = arith.constant 0.000000e+00 : f32
    %47 = vector.broadcast %cst_20 : f32 to vector<128x128xf32>
    %48 = vector.broadcast %cst_21 : f32 to vector<128x128xf32>
    %49 = arith.select %34, %47, %48 : vector<128x128xi1>, vector<128x128xf32>
    %50 = vector.shape_cast %49 : vector<128x128xf32> to vector<1x128x128xf32>
    %cst_22 = arith.constant dense<0.000000e+00> : vector<1xf32>
    %51 = vector.multi_reduction <add>, %50, %cst_22 [1, 2] : vector<1x128x128xf32> to vector<1xf32>
    %52 = vector.shape_cast %51 : vector<1xf32> to vector<1x1x1xf32>
    %53 = vector.extract %52[0, 0, 0] : f32 from vector<1x1x1xf32>
    %cst_23 = arith.constant 0.000000e+00 : f32
    %54 = vector.broadcast %cst_23 : f32 to vector<128x128xf32>
    %55 = arith.subf %54, %40 : vector<128x128xf32>
    %56 = math.exp %55 : vector<128x128xf32>
    %57 = math.log1p %56 : vector<128x128xf32>
    %cst_24 = arith.constant 0.000000e+00 : f32
    %58 = vector.broadcast %cst_24 : f32 to vector<128x128xf32>
    %59 = arith.select %36, %57, %58 : vector<128x128xi1>, vector<128x128xf32>
    %60 = vector.shape_cast %59 : vector<128x128xf32> to vector<1x128x128xf32>
    %cst_25 = arith.constant dense<0.000000e+00> : vector<1xf32>
    %61 = vector.multi_reduction <add>, %60, %cst_25 [1, 2] : vector<1x128x128xf32> to vector<1xf32>
    %62 = vector.shape_cast %61 : vector<1xf32> to vector<1x1x1xf32>
    %63 = vector.extract %62[0, 0, 0] : f32 from vector<1x1x1xf32>
    %64 = tpu.iota {dimensions = array<i32: 2>} : vector<1x1x128xi32>
    %c0_i32_26 = arith.constant 0 : i32
    %65 = vector.broadcast %c0_i32_26 : i32 to vector<1x1x128xi32>
    %66 = arith.cmpi eq, %64, %65 : vector<1x1x128xi32>
    %c1_i32 = arith.constant 1 : i32
    %67 = vector.broadcast %c1_i32 : i32 to vector<1x1x128xi32>
    %68 = arith.cmpi eq, %64, %67 : vector<1x1x128xi32>
    %c2_i32 = arith.constant 2 : i32
    %69 = vector.broadcast %c2_i32 : i32 to vector<1x1x128xi32>
    %70 = arith.cmpi eq, %64, %69 : vector<1x1x128xi32>
    %cst_27 = arith.constant 0.000000e+00 : f32
    %71 = vector.broadcast %63 : f32 to vector<1x1x128xf32>
    %72 = vector.broadcast %cst_27 : f32 to vector<1x1x128xf32>
    %73 = arith.select %70, %71, %72 : vector<1x1x128xi1>, vector<1x1x128xf32>
    %74 = vector.broadcast %53 : f32 to vector<1x1x128xf32>
    %75 = arith.select %68, %74, %73 : vector<1x1x128xi1>, vector<1x1x128xf32>
    %76 = vector.broadcast %46 : f32 to vector<1x1x128xf32>
    %77 = arith.select %66, %76, %75 : vector<1x1x128xi1>, vector<1x1x128xf32>
    %c0_28 = arith.constant 0 : index
    %c0_29 = arith.constant 0 : index
    %c0_30 = arith.constant 0 : index
    %78 = vector.load %arg8[%c0_28, %c0_29, %c0_30] : memref<1x1x128xf32, #tpu.memory_space<vmem>>, vector<1x1x128xf32>
    %79 = arith.addf %78, %77 : vector<1x1x128xf32>
    %c0_31 = arith.constant 0 : index
    %c0_32 = arith.constant 0 : index
    %c0_33 = arith.constant 0 : index
    %80 = vector.load %arg8[%c0_31, %c0_32, %c0_33] : memref<1x1x128xf32, #tpu.memory_space<vmem>>, vector<1x1x128xf32>
    tpu.vector_store %arg8[%c0_31, %c0_32, %c0_33], %79 {strides = array<i32>} : memref<1x1x128xf32, #tpu.memory_space<vmem>>, vector<1x1x128xf32>,
    return
  }
  func.func @transform_0(%arg0: i32, %arg1: i32) -> (i32, i32) {
    %c0_i32 = arith.constant 0 : i32
    %c0_i32_0 = arith.constant 0 : i32
    return %arg0, %c0_i32 : i32, i32
  }
  func.func @transform_1(%arg0: i32, %arg1: i32) -> (i32, i32) {
    %c0_i32 = arith.constant 0 : i32
    %c0_i32_0 = arith.constant 0 : i32
    return %arg1, %c0_i32 : i32, i32
  }
  func.func @transform_2(%arg0: i32, %arg1: i32) -> (i32, i32) {
    %c0_i32 = arith.constant 0 : i32
    %c0_i32_0 = arith.constant 0 : i32
    return %arg0, %c0_i32 : i32, i32
  }
  func.func @transform_3(%arg0: i32, %arg1: i32) -> (i32, i32) {
    %c0_i32 = arith.constant 0 : i32
    %c0_i32_0 = arith.constant 0 : i32
    return %c0_i32, %arg1 : i32, i32
  }
  func.func @transform_4(%arg0: i32, %arg1: i32) -> (i32, i32) {
    %c0_i32 = arith.constant 0 : i32
    %c0_i32_0 = arith.constant 0 : i32
    return %arg0, %c0_i32 : i32, i32
  }
  func.func @transform_5(%arg0: i32, %arg1: i32) -> (i32, i32) {
    %c0_i32 = arith.constant 0 : i32
    %c0_i32_0 = arith.constant 0 : i32
    return %c0_i32, %arg1 : i32, i32
  }
  func.func @transform_6(%arg0: i32, %arg1: i32) -> (i32, i32, i32) {
    %c0_i32 = arith.constant 0 : i32
    %c0_i32_0 = arith.constant 0 : i32
    %c0_i32_1 = arith.constant 0 : i32
    return %arg0, %c0_i32, %c0_i32_0 : i32, i32, i32
  }
}

</mosaic_0001>

<llo_original>
// kernel: tpu_custom_call.1
$region0: #{tpu_custom_call.1}
  #allocation0 [shape = 'u32[]', space=smem, size = 0x4, offset = 0x4, fixed_abs, tag = 'smem constant byte address 0x4 - core index']
  #allocation1 [shape = 'u32[144,128]{1,0:T(1,128)}', space=vmem, size = 0x12000, scoped, tag = 'internal scratch']
  %s0 = inlined_call_operand.hbm [shape: f32[128,128], index: 0, kind: input, shape index: {}]
  %s1 = inlined_call_operand.hbm [shape: f32[128,128], index: 1, kind: input, shape index: {}]
  %s2 = inlined_call_operand.hbm [shape: f32[128,1], index: 2, kind: input, shape index: {}]
  %s3 = inlined_call_operand.hbm [shape: f32[1,128], index: 3, kind: input, shape index: {}]
  %s4 = inlined_call_operand.hbm [shape: s32[128,1], index: 4, kind: input, shape index: {}]
  %s5 = inlined_call_operand.hbm [shape: s32[1,128], index: 5, kind: input, shape index: {}]
  %s6 = inlined_call_operand.hbm [shape: f32[1,1,128], index: 6, kind: output, shape index: {}]
  %s7 = sld [smem:[#allocation0]]
  $region62: #{tpu_custom_call.1} parent=0
    _
  %s9 = ssub.s32 1, %s7
  %s10 = scalar_select 0, %s9, %s7
  $region1: #{tpu_custom_call.1} parent=0
    #allocation2 [shape = 'u8[65536]{0}', space=vmem, size = 0x10000, scoped, tag = 'input window, operand 0, single buffered']
    #allocation3 [shape = 's32[1]{0}', space=sflag, size = 0x4, scoped, tag = 'scoped memory for tpu_custom_call.1']
    #allocation4 [shape = 's32[1]{0}', space=sflag, size = 0x4, scoped, tag = 'scoped memory for tpu_custom_call.1']
    #allocation5 [shape = 'u8[65536]{0}', space=vmem, size = 0x10000, scoped, tag = 'input window, operand 1, single buffered']
    #allocation6 [shape = 's32[1]{0}', space=sflag, size = 0x4, scoped, tag = 'scoped memory for tpu_custom_call.1']
    #allocation7 [shape = 'u8[65536]{0}', space=vmem, size = 0x10000, scoped, tag = 'input window, operand 2, single buffered']
    #allocation8 [shape = 'u8[512]{0}', space=vmem, size = 0x400, scoped, tag = 'input window, operand 3, single buffered']
    #allocation9 [shape = 's32[1]{0}', space=sflag, size = 0x4, scoped, tag = 'scoped memory for tpu_custom_call.1']
    #allocation10 [shape = 'u8[65536]{0}', space=vmem, size = 0x10000, scoped, tag = 'input window, operand 4, single buffered']
    #allocation11 [shape = 'u8[512]{0}', space=vmem, size = 0x400, scoped, tag = 'input window, operand 5, single buffered']
    #allocation12 [shape = 's32[1]{0}', space=sflag, size = 0x4, scoped, tag = 'scoped memory for tpu_custom_call.1']
    #allocation13 [shape = 'u8[512]{0}', space=vmem, size = 0x400, scoped, tag = 'output window, operand 0, single buffered']
    %11 = vsyncpa [#allocation3], 0
    %12 = vsyncpa [#allocation6], 0
    %13 = vsyncpa [#allocation9], 0
    %14 = vsyncpa [#allocation12], 0
    %15 = vsyncpa [#allocation4], 0
    // Predicated region
    $region2: #{tpu_custom_call.1} parent=1 // pred_check
      _
    $region3: #{tpu_custom_call.1} parent=1 // pred_check_branch
      %17 = sbr.rel (0) target = $region5
    $region4: #{tpu_custom_call.1} parent=1 // pred_region
      %s19 = ssub.s32 2048, 2048
      %20 = vsyncadd [#allocation3], %s19
      %s21 = sshll.u32 [#allocation2], 4
      %s22 = int_to_ptr.vmem [resolvable:$true] %s21
      %27 = dma.hbm_to_vmem [thread:$0]  %s0, 2048, %s22, [#allocation3], 128, 128, 8
    $region5: #{tpu_custom_call.1} parent=1 // pred_fallthru
      _
    // Predicated region
    $region6: #{tpu_custom_call.1} parent=1 // pred_check
      _
    $region7: #{tpu_custom_call.1} parent=1 // pred_check_branch
      %29 = sbr.rel (0) target = $region9
    $region8: #{tpu_custom_call.1} parent=1 // pred_region
      %s31 = ssub.s32 2048, 2048
      %32 = vsyncadd [#allocation6], %s31
      %s33 = sshll.u32 [#allocation5], 4
      %s34 = int_to_ptr.vmem [resolvable:$true] %s33
      %39 = dma.hbm_to_vmem [thread:$0]  %s1, 2048, %s34, [#allocation6], 128, 128, 8
    $region9: #{tpu_custom_call.1} parent=1 // pred_fallthru
      _
    // Predicated region
    $region10: #{tpu_custom_call.1} parent=1 // pred_check
      _
    $region11: #{tpu_custom_call.1} parent=1 // pred_check_branch
      %41 = sbr.rel (0) target = $region13
    $region12: #{tpu_custom_call.1} parent=1 // pred_region
      %s43 = ssub.s32 2048, 2048
      %44 = vsyncadd [#allocation6], %s43
      %s45 = sshll.u32 [#allocation7], 4
      %s46 = int_to_ptr.vmem [resolvable:$true] %s45
      %51 = dma.hbm_to_vmem [thread:$0]  %s2, 2048, %s46, [#allocation6], 128, 128, 8
    $region13: #{tpu_custom_call.1} parent=1 // pred_fallthru
      _
    // Predicated region
    $region14: #{tpu_custom_call.1} parent=1 // pred_check
      _
    $region15: #{tpu_custom_call.1} parent=1 // pred_check_branch
      %53 = sbr.rel (0) target = $region17
    $region16: #{tpu_custom_call.1} parent=1 // pred_region
      %s55 = ssub.s32 16, 16
      %56 = vsyncadd [#allocation9], %s55
      %s58 = sshll.u32 [#allocation8], 4
      %s59 = int_to_ptr.vmem [resolvable:$true] %s58
      %61 = dma.hbm_to_vmem [thread:$0]  %s3, 16, %s59, [#allocation9]
    $region17: #{tpu_custom_call.1} parent=1 // pred_fallthru
      _
    // Predicated region
    $region18: #{tpu_custom_call.1} parent=1 // pred_check
      _
    $region19: #{tpu_custom_call.1} parent=1 // pred_check_branch
      %63 = sbr.rel (0) target = $region21
    $region20: #{tpu_custom_call.1} parent=1 // pred_region
      %s65 = ssub.s32 2048, 2048
      %66 = vsyncadd [#allocation9], %s65
      %s67 = sshll.u32 [#allocation10], 4
      %s68 = int_to_ptr.vmem [resolvable:$true] %s67
      %73 = dma.hbm_to_vmem [thread:$0]  %s4, 2048, %s68, [#allocation9], 128, 128, 8
    $region21: #{tpu_custom_call.1} parent=1 // pred_fallthru
      _
    // Predicated region
    $region22: #{tpu_custom_call.1} parent=1 // pred_check
      _
    $region23: #{tpu_custom_call.1} parent=1 // pred_check_branch
      %75 = sbr.rel (0) target = $region25
    $region24: #{tpu_custom_call.1} parent=1 // pred_region
      %s77 = ssub.s32 16, 16
      %78 = vsyncadd [#allocation12], %s77
      %s80 = sshll.u32 [#allocation11], 4
      %s81 = int_to_ptr.vmem [resolvable:$true] %s80
      %83 = dma.hbm_to_vmem [thread:$0]  %s5, 16, %s81, [#allocation12]
    $region25: #{tpu_custom_call.1} parent=1 // pred_fallthru
      _
    // Predicated region
    $region26: #{tpu_custom_call.1} parent=1 // pred_check
      _
    $region27: #{tpu_custom_call.1} parent=1 // pred_check_branch
      %85 = sbr.rel (0) target = $region29
    $region28: #{tpu_custom_call.1} parent=1 // pred_region
      %86 = dma.done [#allocation3], 2048
    $region29: #{tpu_custom_call.1} parent=1 // pred_fallthru
      _
    // Predicated region
    $region30: #{tpu_custom_call.1} parent=1 // pred_check
      _
    $region31: #{tpu_custom_call.1} parent=1 // pred_check_branch
      %88 = sbr.rel (0) target = $region33
    $region32: #{tpu_custom_call.1} parent=1 // pred_region
      %89 = dma.done [#allocation6], 2048
    $region33: #{tpu_custom_call.1} parent=1 // pred_fallthru
      _
    // Predicated region
    $region34: #{tpu_custom_call.1} parent=1 // pred_check
      _
    $region35: #{tpu_custom_call.1} parent=1 // pred_check_branch
      %91 = sbr.rel (0) target = $region37
    $region36: #{tpu_custom_call.1} parent=1 // pred_region
      %92 = dma.done [#allocation6], 2048
    $region37: #{tpu_custom_call.1} parent=1 // pred_fallthru
      _
    // Predicated region
    $region38: #{tpu_custom_call.1} parent=1 // pred_check
      _
    $region39: #{tpu_custom_call.1} parent=1 // pred_check_branch
      %94 = sbr.rel (0) target = $region41
    $region40: #{tpu_custom_call.1} parent=1 // pred_region
      %95 = dma.done [#allocation9], 16
    $region41: #{tpu_custom_call.1} parent=1 // pred_fallthru
      _
    // Predicated region
    $region42: #{tpu_custom_call.1} parent=1 // pred_check
      _
    $region43: #{tpu_custom_call.1} parent=1 // pred_check_branch
      %97 = sbr.rel (0) target = $region45
    $region44: #{tpu_custom_call.1} parent=1 // pred_region
      %98 = dma.done [#allocation9], 2048
    $region45: #{tpu_custom_call.1} parent=1 // pred_fallthru
      _
    // Predicated region
    $region46: #{tpu_custom_call.1} parent=1 // pred_check
      _
    $region47: #{tpu_custom_call.1} parent=1 // pred_check_branch
      %100 = sbr.rel (0) target = $region49
    $region48: #{tpu_custom_call.1} parent=1 // pred_region
      %101 = dma.done [#allocation12], 16
    $region49: #{tpu_custom_call.1} parent=1 // pred_fallthru
      _
    %p102 = scmp.eq.s32.totalorder 0, 0
    // Predicated region
    $region50: #{tpu_custom_call.1} parent=1 // pred_check
      %p103 = pneg %p102
    $region51: #{tpu_custom_call.1} parent=1 // pred_check_branch
      %105 = sbr.rel (%p103) target = $region53
    $region52: #{tpu_custom_call.1} parent=1 // pred_region
      %106 = vst [vmem:[#allocation13] sm:$0x1] 0.0
    $region53: #{tpu_custom_call.1} parent=1 // pred_fallthru
      _
    %v107 = vld [vmem:[#allocation2] sm:$0xff]
    %v108 = vld [vmem:[#allocation2 + $0x8] sm:$0xff]
    %v109 = vld [vmem:[#allocation2 + $0x10] sm:$0xff]
    %v110 = vld [vmem:[#allocation2 + $0x18] sm:$0xff]
    %v111 = vld [vmem:[#allocation2 + $0x20] sm:$0xff]
    %v112 = vld [vmem:[#allocation2 + $0x28] sm:$0xff]
    %v113 = vld [vmem:[#allocation2 + $0x30] sm:$0xff]
    %v114 = vld [vmem:[#allocation2 + $0x38] sm:$0xff]
    %v115 = vld [vmem:[#allocation2 + $0x40] sm:$0xff]
    %v116 = vld [vmem:[#allocation2 + $0x48] sm:$0xff]
    %v117 = vld [vmem:[#allocation2 + $0x50] sm:$0xff]
    %v118 = vld [vmem:[#allocation2 + $0x58] sm:$0xff]
    %v119 = vld [vmem:[#allocation2 + $0x60] sm:$0xff]
    %v120 = vld [vmem:[#allocation2 + $0x68] sm:$0xff]
    %v121 = vld [vmem:[#allocation2 + $0x70] sm:$0xff]
    %v122 = vld [vmem:[#allocation2 + $0x78] sm:$0xff]
    %v123 = vld [vmem:[#allocation5] sm:$0xff]
    %v124 = vld [vmem:[#allocation5 + $0x8] sm:$0xff]
    %v125 = vld [vmem:[#allocation5 + $0x10] sm:$0xff]
    %v126 = vld [vmem:[#allocation5 + $0x18] sm:$0xff]
    %v127 = vld [vmem:[#allocation5 + $0x20] sm:$0xff]
    %v128 = vld [vmem:[#allocation5 + $0x28] sm:$0xff]
    %v129 = vld [vmem:[#allocation5 + $0x30] sm:$0xff]
    %v130 = vld [vmem:[#allocation5 + $0x38] sm:$0xff]
    %v131 = vld [vmem:[#allocation5 + $0x40] sm:$0xff]
    %v132 = vld [vmem:[#allocation5 + $0x48] sm:$0xff]
    %v133 = vld [vmem:[#allocation5 + $0x50] sm:$0xff]
    %v134 = vld [vmem:[#allocation5 + $0x58] sm:$0xff]
    %v135 = vld [vmem:[#allocation5 + $0x60] sm:$0xff]
    %v136 = vld [vmem:[#allocation5 + $0x68] sm:$0xff]
    %v137 = vld [vmem:[#allocation5 + $0x70] sm:$0xff]
    %v138 = vld [vmem:[#allocation5 + $0x78] sm:$0xff]
    %139 = vmatprep.subr.mxu0 0.0
    %140 = vmatpush1.xpose.msra.mxu0 %v123
    %141 = vmatprep.subr.mxu0 0.0
    %142 = vmatpush1.xpose.msra.mxu0 %v124
    %143 = vmatprep.subr.mxu0 0.0
    %144 = vmatpush1.xpose.msra.mxu0 %v125
    %145 = vmatprep.subr.mxu0 0.0
    %146 = vmatpush1.xpose.msra.mxu0 %v126
    %147 = vmatprep.subr.mxu0 0.0
    %148 = vmatpush1.xpose.msra.mxu0 %v127
    %149 = vmatprep.subr.mxu0 0.0
    %150 = vmatpush1.xpose.msra.mxu0 %v128
    %151 = vmatprep.subr.mxu0 0.0
    %152 = vmatpush1.xpose.msra.mxu0 %v129
    %153 = vmatprep.subr.mxu0 0.0
    %154 = vmatpush1.xpose.msra.mxu0 %v130
    %155 = vmatprep.subr.mxu0 0.0
    %156 = vmatpush1.xpose.msra.mxu0 %v131
    %157 = vmatprep.subr.mxu0 0.0
    %158 = vmatpush1.xpose.msra.mxu0 %v132
    %159 = vmatprep.subr.mxu0 0.0
    %160 = vmatpush1.xpose.msra.mxu0 %v133
    %161 = vmatprep.subr.mxu0 0.0
    %162 = vmatpush1.xpose.msra.mxu0 %v134
    %163 = vmatprep.subr.mxu0 0.0
    %164 = vmatpush1.xpose.msra.mxu0 %v135
    %165 = vmatprep.subr.mxu0 0.0
    %166 = vmatpush1.xpose.msra.mxu0 %v136
    %167 = vmatprep.subr.mxu0 0.0
    %168 = vmatpush1.xpose.msra.mxu0 %v137
    %169 = vmatprep.subr.mxu0 0.0
    %170 = vmatpush1.xpose.msra.mxu0 %v138
    %171 = vmatprep.subr.mxu0 0.0
    %172 = vmatpush1.xpose.msra.mxu0 0.0
    %173 = vmatprep.subr.mxu0 0.0
    %174 = vmatpush1.xpose.msra.mxu0 0.0
    %175 = vmatprep.subr.mxu0 0.0
    %176 = vmatpush1.xpose.msra.mxu0 0.0
    %177 = vmatprep.subr.mxu0 0.0
    %178 = vmatpush1.xpose.msra.mxu0 0.0
    %179 = vmatprep.subr.mxu0 0.0
    %180 = vmatpush1.xpose.msra.mxu0 0.0
    %181 = vmatprep.subr.mxu0 0.0
    %182 = vmatpush1.xpose.msra.mxu0 0.0
    %183 = vmatprep.subr.mxu0 0.0
    %184 = vmatpush1.xpose.msra.mxu0 0.0
    %185 = vmatprep.subr.mxu0 0.0
    %186 = vmatpush1.xpose.msra.mxu0 0.0
    %187 = vmatprep.subr.mxu0 0.0
    %188 = vmatpush1.xpose.msra.mxu0 0.0
    %189 = vmatprep.subr.mxu0 0.0
    %190 = vmatpush1.xpose.msra.mxu0 0.0
    %191 = vmatprep.subr.mxu0 0.0
    %192 = vmatpush1.xpose.msra.mxu0 0.0
    %193 = vmatprep.subr.mxu0 0.0
    %194 = vmatpush1.xpose.msra.mxu0 0.0
    %195 = vmatprep.subr.mxu0 0.0
    %196 = vmatpush1.xpose.msra.mxu0 0.0
    %197 = vmatprep.subr.mxu0 0.0
    %198 = vmatpush1.xpose.msra.mxu0 0.0
    %199 = vmatprep.subr.mxu0 0.0
    %200 = vmatpush1.xpose.msra.mxu0 0.0
    %201 = vmatprep.subr.mxu0 0.0
    %202 = vmatpush1.xpose.msra.mxu0 0.0
    %203 = vmatprep.mubr.f32.mxu0 0.0
    %204 = vmatmul.mubr.f32.gmra.mrb[0].mxu0 %v107
    %v205 = vpop.f32.mrb[0].mxu0
    %v206 = vadd.f32 0.0, %v205
    %v207 = vpop.f32.mrb[0].mxu0
    %208 = vmatprep.mubr.f32.mxu0 0.0
    %209 = vmatmul.mubr.f32.gmra.mrb[0].mxu0 %v108
    %v210 = vpop.f32.mrb[0].mxu0
    %v211 = vadd.f32 0.0, %v210
    %v212 = vpop.f32.mrb[0].mxu0
    %213 = vmatprep.mubr.f32.mxu0 0.0
    %214 = vmatmul.mubr.f32.gmra.mrb[0].mxu0 %v109
    %v215 = vpop.f32.mrb[0].mxu0
    %v216 = vadd.f32 0.0, %v215
    %v217 = vpop.f32.mrb[0].mxu0
    %218 = vmatprep.mubr.f32.mxu0 0.0
    %219 = vmatmul.mubr.f32.gmra.mrb[0].mxu0 %v110
    %v220 = vpop.f32.mrb[0].mxu0
    %v221 = vadd.f32 0.0, %v220
    %v222 = vpop.f32.mrb[0].mxu0
    %223 = vmatprep.mubr.f32.mxu0 0.0
    %224 = vmatmul.mubr.f32.gmra.mrb[0].mxu0 %v111
    %v225 = vpop.f32.mrb[0].mxu0
    %v226 = vadd.f32 0.0, %v225
    %v227 = vpop.f32.mrb[0].mxu0
    %228 = vmatprep.mubr.f32.mxu0 0.0
    %229 = vmatmul.mubr.f32.gmra.mrb[0].mxu0 %v112
    %v230 = vpop.f32.mrb[0].mxu0
    %v231 = vadd.f32 0.0, %v230
    %v232 = vpop.f32.mrb[0].mxu0
    %233 = vmatprep.mubr.f32.mxu0 0.0
    %234 = vmatmul.mubr.f32.gmra.mrb[0].mxu0 %v113
    %v235 = vpop.f32.mrb[0].mxu0
    %v236 = vadd.f32 0.0, %v235
    %v237 = vpop.f32.mrb[0].mxu0
    %238 = vmatprep.mubr.f32.mxu0 0.0
    %239 = vmatmul.mubr.f32.gmra.mrb[0].mxu0 %v114
    %v240 = vpop.f32.mrb[0].mxu0
    %v241 = vadd.f32 0.0, %v240
    %v242 = vpop.f32.mrb[0].mxu0
    %243 = vmatprep.mubr.f32.mxu0 0.0
    %244 = vmatmul.mubr.f32.gmra.mrb[0].mxu0 %v115
    %v245 = vpop.f32.mrb[0].mxu0
    %v246 = vadd.f32 0.0, %v245
    %v247 = vpop.f32.mrb[0].mxu0
    %248 = vmatprep.mubr.f32.mxu0 0.0
    %249 = vmatmul.mubr.f32.gmra.mrb[0].mxu0 %v116
    %v250 = vpop.f32.mrb[0].mxu0
    %v251 = vadd.f32 0.0, %v250
    %v252 = vpop.f32.mrb[0].mxu0
    %253 = vmatprep.mubr.f32.mxu0 0.0
    %254 = vmatmul.mubr.f32.gmra.mrb[0].mxu0 %v117
    %v255 = vpop.f32.mrb[0].mxu0
    %v256 = vadd.f32 0.0, %v255
    %v257 = vpop.f32.mrb[0].mxu0
    %258 = vmatprep.mubr.f32.mxu0 0.0
    %259 = vmatmul.mubr.f32.gmra.mrb[0].mxu0 %v118
    %v260 = vpop.f32.mrb[0].mxu0
    %v261 = vadd.f32 0.0, %v260
    %v262 = vpop.f32.mrb[0].mxu0
    %263 = vmatprep.mubr.f32.mxu0 0.0
    %264 = vmatmul.mubr.f32.gmra.mrb[0].mxu0 %v119
    %v265 = vpop.f32.mrb[0].mxu0
    %v266 = vadd.f32 0.0, %v265
    %v267 = vpop.f32.mrb[0].mxu0
    %268 = vmatprep.mubr.f32.mxu0 0.0
    %269 = vmatmul.mubr.f32.gmra.mrb[0].mxu0 %v120
    %v270 = vpop.f32.mrb[0].mxu0
    %v271 = vadd.f32 0.0, %v270
    %v272 = vpop.f32.mrb[0].mxu0
    %273 = vmatprep.mubr.f32.mxu0 0.0
    %274 = vmatmul.mubr.f32.gmra.mrb[0].mxu0 %v121
    %v275 = vpop.f32.mrb[0].mxu0
    %v276 = vadd.f32 0.0, %v275
    %v277 = vpop.f32.mrb[0].mxu0
    %278 = vmatprep.mubr.f32.mxu0 0.0
    %279 = vmatmul.mubr.f32.gmra.mrb[0].mxu0 %v122
    %v280 = vpop.f32.mrb[0].mxu0
    %v281 = vadd.f32 0.0, %v280
    %v282 = vpop.f32.mrb[0].mxu0
    %283 = vdwg.mxu0
    %v284 = vld [vmem:[#allocation7] sm:$0xff]
    %v285 = vld [vmem:[#allocation7 + $0x8] sm:$0xff]
    %v286 = vld [vmem:[#allocation7 + $0x10] sm:$0xff]
    %v287 = vld [vmem:[#allocation7 + $0x18] sm:$0xff]
    %v288 = vld [vmem:[#allocation7 + $0x20] sm:$0xff]
    %v289 = vld [vmem:[#allocation7 + $0x28] sm:$0xff]
    %v290 = vld [vmem:[#allocation7 + $0x30] sm:$0xff]
    %v291 = vld [vmem:[#allocation7 + $0x38] sm:$0xff]
    %v292 = vld [vmem:[#allocation7 + $0x40] sm:$0xff]
    %v293 = vld [vmem:[#allocation7 + $0x48] sm:$0xff]
    %v294 = vld [vmem:[#allocation7 + $0x50] sm:$0xff]
    %v295 = vld [vmem:[#allocation7 + $0x58] sm:$0xff]
    %v296 = vld [vmem:[#allocation7 + $0x60] sm:$0xff]
    %v297 = vld [vmem:[#allocation7 + $0x68] sm:$0xff]
    %v298 = vld [vmem:[#allocation7 + $0x70] sm:$0xff]
    %v299 = vld [vmem:[#allocation7 + $0x78] sm:$0xff]
    %v300 = vld [vmem:[#allocation8] sm:$0x1]
    %302 = vset.pattern.permute.xlu0 0
    %303 = vperm.xlu0 %302, %v284
    %v304 = vpop.permute.xlu0 %303
    %307 = vset.pattern.permute.xlu0 0
    %308 = vperm.xlu0 %307, %v285
    %v309 = vpop.permute.xlu0 %308
    %312 = vset.pattern.permute.xlu0 0
    %313 = vperm.xlu0 %312, %v286
    %v314 = vpop.permute.xlu0 %313
    %317 = vset.pattern.permute.xlu0 0
    %318 = vperm.xlu0 %317, %v287
    %v319 = vpop.permute.xlu0 %318
    %322 = vset.pattern.permute.xlu0 0
    %323 = vperm.xlu0 %322, %v288
    %v324 = vpop.permute.xlu0 %323
    %327 = vset.pattern.permute.xlu0 0
    %328 = vperm.xlu0 %327, %v289
    %v329 = vpop.permute.xlu0 %328
    %332 = vset.pattern.permute.xlu0 0
    %333 = vperm.xlu0 %332, %v290
    %v334 = vpop.permute.xlu0 %333
    %337 = vset.pattern.permute.xlu0 0
    %338 = vperm.xlu0 %337, %v291
    %v339 = vpop.permute.xlu0 %338
    %342 = vset.pattern.permute.xlu0 0
    %343 = vperm.xlu0 %342, %v292
    %v344 = vpop.permute.xlu0 %343
    %347 = vset.pattern.permute.xlu0 0
    %348 = vperm.xlu0 %347, %v293
    %v349 = vpop.permute.xlu0 %348
    %352 = vset.pattern.permute.xlu0 0
    %353 = vperm.xlu0 %352, %v294
    %v354 = vpop.permute.xlu0 %353
    %357 = vset.pattern.permute.xlu0 0
    %358 = vperm.xlu0 %357, %v295
    %v359 = vpop.permute.xlu0 %358
    %362 = vset.pattern.permute.xlu0 0
    %363 = vperm.xlu0 %362, %v296
    %v364 = vpop.permute.xlu0 %363
    %367 = vset.pattern.permute.xlu0 0
    %368 = vperm.xlu0 %367, %v297
    %v369 = vpop.permute.xlu0 %368
    %372 = vset.pattern.permute.xlu0 0
    %373 = vperm.xlu0 %372, %v298
    %v374 = vpop.permute.xlu0 %373
    %377 = vset.pattern.permute.xlu0 0
    %378 = vperm.xlu0 %377, %v299
    %v379 = vpop.permute.xlu0 %378
    %v382 = vlaneseq
    %v383 = vshrl.u32 %v382, 7
    %v384 = vsub.s32 0, %v383
    %v385 = vrot.slane %v300, %v384
    %v387 = vadd.f32 %v304, %v385
    %v388 = vadd.f32 %v309, %v385
    %v389 = vadd.f32 %v314, %v385
    %v390 = vadd.f32 %v319, %v385
    %v391 = vadd.f32 %v324, %v385
    %v392 = vadd.f32 %v329, %v385
    %v393 = vadd.f32 %v334, %v385
    %v394 = vadd.f32 %v339, %v385
    %v395 = vadd.f32 %v344, %v385
    %v396 = vadd.f32 %v349, %v385
    %v397 = vadd.f32 %v354, %v385
    %v398 = vadd.f32 %v359, %v385
    %v399 = vadd.f32 %v364, %v385
    %v400 = vadd.f32 %v369, %v385
    %v401 = vadd.f32 %v374, %v385
    %v402 = vadd.f32 %v379, %v385
    %v403 = vmul.f32 %v206, 2.0
    %v404 = vmul.f32 %v211, 2.0
    %v405 = vmul.f32 %v216, 2.0
    %v406 = vmul.f32 %v221, 2.0
    %v407 = vmul.f32 %v226, 2.0
    %v408 = vmul.f32 %v231, 2.0
    %v409 = vmul.f32 %v236, 2.0
    %v410 = vmul.f32 %v241, 2.0
    %v411 = vmul.f32 %v246, 2.0
    %v412 = vmul.f32 %v251, 2.0
    %v413 = vmul.f32 %v256, 2.0
    %v414 = vmul.f32 %v261, 2.0
    %v415 = vmul.f32 %v266, 2.0
    %v416 = vmul.f32 %v271, 2.0
    %v417 = vmul.f32 %v276, 2.0
    %v418 = vmul.f32 %v281, 2.0
    %v419 = vsub.f32 %v387, %v403
    %v420 = vsub.f32 %v388, %v404
    %v421 = vsub.f32 %v389, %v405
    %v422 = vsub.f32 %v390, %v406
    %v423 = vsub.f32 %v391, %v407
    %v424 = vsub.f32 %v392, %v408
    %v425 = vsub.f32 %v393, %v409
    %v426 = vsub.f32 %v394, %v410
    %v427 = vsub.f32 %v395, %v411
    %v428 = vsub.f32 %v396, %v412
    %v429 = vsub.f32 %v397, %v413
    %v430 = vsub.f32 %v398, %v414
    %v431 = vsub.f32 %v399, %v415
    %v432 = vsub.f32 %v400, %v416
    %v433 = vsub.f32 %v401, %v417
    %v434 = vsub.f32 %v402, %v418
    %v435 = vmax.f32 %v419, 0.0
    %v436 = vmax.f32 %v420, 0.0
    %v437 = vmax.f32 %v421, 0.0
    %v438 = vmax.f32 %v422, 0.0
    %v439 = vmax.f32 %v423, 0.0
    %v440 = vmax.f32 %v424, 0.0
    %v441 = vmax.f32 %v425, 0.0
    %v442 = vmax.f32 %v426, 0.0
    %v443 = vmax.f32 %v427, 0.0
    %v444 = vmax.f32 %v428, 0.0
    %v445 = vmax.f32 %v429, 0.0
    %v446 = vmax.f32 %v430, 0.0
    %v447 = vmax.f32 %v431, 0.0
    %v448 = vmax.f32 %v432, 0.0
    %v449 = vmax.f32 %v433, 0.0
    %v450 = vmax.f32 %v434, 0.0
    %s451 = smul.u32 0, 128
    %v452 = vlaneseq
    %v453 = vshrl.u32 %v452, 7
    %v454 = vadd.s32 %v453, 8
    %v455 = vadd.s32 %v453, 16
    %v456 = vadd.s32 %v453, 24
    %v457 = vadd.s32 %v453, 32
    %v458 = vadd.s32 %v453, 40
    %v459 = vadd.s32 %v453, 48
    %v460 = vadd.s32 %v453, 56
    %v461 = vadd.s32 %v453, 64
    %v462 = vadd.s32 %v453, 72
    %v463 = vadd.s32 %v453, 80
    %v464 = vadd.s32 %v453, 88
    %v465 = vadd.s32 %v453, 96
    %v466 = vadd.s32 %v453, 104
    %v467 = vadd.s32 %v453, 112
    %v468 = vadd.s32 %v453, 120
    %v469 = vstv %s451
    %v470 = vadd.s32 %v469, %v453
    %v471 = vadd.s32 %v469, %v454
    %v472 = vadd.s32 %v469, %v455
    %v473 = vadd.s32 %v469, %v456
    %v474 = vadd.s32 %v469, %v457
    %v475 = vadd.s32 %v469, %v458
    %v476 = vadd.s32 %v469, %v459
    %v477 = vadd.s32 %v469, %v460
    %v478 = vadd.s32 %v469, %v461
    %v479 = vadd.s32 %v469, %v462
    %v480 = vadd.s32 %v469, %v463
    %v481 = vadd.s32 %v469, %v464
    %v482 = vadd.s32 %v469, %v465
    %v483 = vadd.s32 %v469, %v466
    %v484 = vadd.s32 %v469, %v467
    %v485 = vadd.s32 %v469, %v468
    %s486 = smul.u32 0, 128
    %v487 = vlaneseq
    %v488 = vand.u32 %v487, 127
    %v489 = vstv %s486
    %v490 = vadd.s32 %v489, %v488
    %vm491 = vcmp.lt.s32.totalorder %v470, 8
    %vm492 = vcmp.lt.s32.totalorder %v471, 8
    %vm493 = vcmp.lt.s32.totalorder %v472, 8
    %vm494 = vcmp.lt.s32.totalorder %v473, 8
    %vm495 = vcmp.lt.s32.totalorder %v474, 8
    %vm496 = vcmp.lt.s32.totalorder %v475, 8
    %vm497 = vcmp.lt.s32.totalorder %v476, 8
    %vm498 = vcmp.lt.s32.totalorder %v477, 8
    %vm499 = vcmp.lt.s32.totalorder %v478, 8
    %vm500 = vcmp.lt.s32.totalorder %v479, 8
    %vm501 = vcmp.lt.s32.totalorder %v480, 8
    %vm502 = vcmp.lt.s32.totalorder %v481, 8
    %vm503 = vcmp.lt.s32.totalorder %v482, 8
    %vm504 = vcmp.lt.s32.totalorder %v483, 8
    %vm505 = vcmp.lt.s32.totalorder %v484, 8
    %vm506 = vcmp.lt.s32.totalorder %v485, 8
    %vm507 = vcmp.lt.s32.totalorder %v490, 8
    %vm508 = vmand %vm491, %vm507
    %vm509 = vmand %vm492, %vm507
    %vm510 = vmand %vm493, %vm507
    %vm511 = vmand %vm494, %vm507
    %vm512 = vmand %vm495, %vm507
    %vm513 = vmand %vm496, %vm507
    %vm514 = vmand %vm497, %vm507
    %vm515 = vmand %vm498, %vm507
    %vm516 = vmand %vm499, %vm507
    %vm517 = vmand %vm500, %vm507
    %vm518 = vmand %vm501, %vm507
    %vm519 = vmand %vm502, %vm507
    %vm520 = vmand %vm503, %vm507
    %vm521 = vmand %vm504, %vm507
    %vm522 = vmand %vm505, %vm507
    %vm523 = vmand %vm506, %vm507
    %v524 = vld [vmem:[#allocation10] sm:$0xff]
    %v525 = vld [vmem:[#allocation10 + $0x8] sm:$0xff]
    %v526 = vld [vmem:[#allocation10 + $0x10] sm:$0xff]
    %v527 = vld [vmem:[#allocation10 + $0x18] sm:$0xff]
    %v528 = vld [vmem:[#allocation10 + $0x20] sm:$0xff]
    %v529 = vld [vmem:[#allocation10 + $0x28] sm:$0xff]
    %v530 = vld [vmem:[#allocation10 + $0x30] sm:$0xff]
    %v531 = vld [vmem:[#allocation10 + $0x38] sm:$0xff]
    %v532 = vld [vmem:[#allocation10 + $0x40] sm:$0xff]
    %v533 = vld [vmem:[#allocation10 + $0x48] sm:$0xff]
    %v534 = vld [vmem:[#allocation10 + $0x50] sm:$0xff]
    %v535 = vld [vmem:[#allocation10 + $0x58] sm:$0xff]
    %v536 = vld [vmem:[#allocation10 + $0x60] sm:$0xff]
    %v537 = vld [vmem:[#allocation10 + $0x68] sm:$0xff]
    %v538 = vld [vmem:[#allocation10 + $0x70] sm:$0xff]
    %v539 = vld [vmem:[#allocation10 + $0x78] sm:$0xff]
    %v540 = vld [vmem:[#allocation11] sm:$0x1]
    %541 = vset.pattern.permute.xlu0 0
    %542 = vperm.xlu0 %541, %v524
    %v543 = vpop.permute.xlu0 %542
    %544 = vset.pattern.permute.xlu0 0
    %545 = vperm.xlu0 %544, %v525
    %v546 = vpop.permute.xlu0 %545
    %547 = vset.pattern.permute.xlu0 0
    %548 = vperm.xlu0 %547, %v526
    %v549 = vpop.permute.xlu0 %548
    %550 = vset.pattern.permute.xlu0 0
    %551 = vperm.xlu0 %550, %v527
    %v552 = vpop.permute.xlu0 %551
    %553 = vset.pattern.permute.xlu0 0
    %554 = vperm.xlu0 %553, %v528
    %v555 = vpop.permute.xlu0 %554
    %556 = vset.pattern.permute.xlu0 0
    %557 = vperm.xlu0 %556, %v529
    %v558 = vpop.permute.xlu0 %557
    %559 = vset.pattern.permute.xlu0 0
    %560 = vperm.xlu0 %559, %v530
    %v561 = vpop.permute.xlu0 %560
    %562 = vset.pattern.permute.xlu0 0
    %563 = vperm.xlu0 %562, %v531
    %v564 = vpop.permute.xlu0 %563
    %565 = vset.pattern.permute.xlu0 0
    %566 = vperm.xlu0 %565, %v532
    %v567 = vpop.permute.xlu0 %566
    %568 = vset.pattern.permute.xlu0 0
    %569 = vperm.xlu0 %568, %v533
    %v570 = vpop.permute.xlu0 %569
    %571 = vset.pattern.permute.xlu0 0
    %572 = vperm.xlu0 %571, %v534
    %v573 = vpop.permute.xlu0 %572
    %574 = vset.pattern.permute.xlu0 0
    %575 = vperm.xlu0 %574, %v535
    %v576 = vpop.permute.xlu0 %575
    %577 = vset.pattern.permute.xlu0 0
    %578 = vperm.xlu0 %577, %v536
    %v579 = vpop.permute.xlu0 %578
    %580 = vset.pattern.permute.xlu0 0
    %581 = vperm.xlu0 %580, %v537
    %v582 = vpop.permute.xlu0 %581
    %583 = vset.pattern.permute.xlu0 0
    %584 = vperm.xlu0 %583, %v538
    %v585 = vpop.permute.xlu0 %584
    %586 = vset.pattern.permute.xlu0 0
    %587 = vperm.xlu0 %586, %v539
    %v588 = vpop.permute.xlu0 %587
    %v589 = vlaneseq
    %v590 = vshrl.u32 %v589, 7
    %v591 = vsub.s32 0, %v590
    %v592 = vrot.slane %v540, %v591
    %vm593 = vcmp.eq.s32.totalorder %v543, %v592
    %vm594 = vcmp.eq.s32.totalorder %v546, %v592
    %vm595 = vcmp.eq.s32.totalorder %v549, %v592
    %vm596 = vcmp.eq.s32.totalorder %v552, %v592
    %vm597 = vcmp.eq.s32.totalorder %v555, %v592
    %vm598 = vcmp.eq.s32.totalorder %v558, %v592
    %vm599 = vcmp.eq.s32.totalorder %v561, %v592
    %vm600 = vcmp.eq.s32.totalorder %v564, %v592
    %vm601 = vcmp.eq.s32.totalorder %v567, %v592
    %vm602 = vcmp.eq.s32.totalorder %v570, %v592
    %vm603 = vcmp.eq.s32.totalorder %v573, %v592
    %vm604 = vcmp.eq.s32.totalorder %v576, %v592
    %vm605 = vcmp.eq.s32.totalorder %v579, %v592
    %vm606 = vcmp.eq.s32.totalorder %v582, %v592
    %vm607 = vcmp.eq.s32.totalorder %v585, %v592
    %vm608 = vcmp.eq.s32.totalorder %v588, %v592
    %vm609 = vmand %vm593, %vm508
    %vm610 = vmand %vm594, %vm509
    %vm611 = vmand %vm595, %vm510
    %vm612 = vmand %vm596, %vm511
    %vm613 = vmand %vm597, %vm512
    %vm614 = vmand %vm598, %vm513
    %vm615 = vmand %vm599, %vm514
    %vm616 = vmand %vm600, %vm515
    %vm617 = vmand %vm601, %vm516
    %vm618 = vmand %vm602, %vm517
    %vm619 = vmand %vm603, %vm518
    %vm620 = vmand %vm604, %vm519
    %vm621 = vmand %vm605, %vm520
    %vm622 = vmand %vm606, %vm521
    %vm623 = vmand %vm607, %vm522
    %vm624 = vmand %vm608, %vm523
    %vm625 = vmxor %vm609, 1
    %vm626 = vmxor %vm610, 1
    %vm627 = vmxor %vm611, 1
    %vm628 = vmxor %vm612, 1
    %vm629 = vmxor %vm613, 1
    %vm630 = vmxor %vm614, 1
    %vm631 = vmxor %vm615, 1
    %vm632 = vmxor %vm616, 1
    %vm633 = vmxor %vm617, 1
    %vm634 = vmxor %vm618, 1
    %vm635 = vmxor %vm619, 1
    %vm636 = vmxor %vm620, 1
    %vm637 = vmxor %vm621, 1
    %vm638 = vmxor %vm622, 1
    %vm639 = vmxor %vm623, 1
    %vm640 = vmxor %vm624, 1
    %vm641 = vmand %vm625, %vm508
    %vm642 = vmand %vm626, %vm509
    %vm643 = vmand %vm627, %vm510
    %vm644 = vmand %vm628, %vm511
    %vm645 = vmand %vm629, %vm512
    %vm646 = vmand %vm630, %vm513
    %vm647 = vmand %vm631, %vm514
    %vm648 = vmand %vm632, %vm515
    %vm649 = vmand %vm633, %vm516
    %vm650 = vmand %vm634, %vm517
    %vm651 = vmand %vm635, %vm518
    %vm652 = vmand %vm636, %vm519
    %vm653 = vmand %vm637, %vm520
    %vm654 = vmand %vm638, %vm521
    %vm655 = vmand %vm639, %vm522
    %vm656 = vmand %vm640, %vm523
    %vm657 = vcmp.eq.s32.totalorder %v470, %v490
    %vm658 = vcmp.eq.s32.totalorder %v471, %v490
    %vm659 = vcmp.eq.s32.totalorder %v472, %v490
    %vm660 = vcmp.eq.s32.totalorder %v473, %v490
    %vm661 = vcmp.eq.s32.totalorder %v474, %v490
    %vm662 = vcmp.eq.s32.totalorder %v475, %v490
    %vm663 = vcmp.eq.s32.totalorder %v476, %v490
    %vm664 = vcmp.eq.s32.totalorder %v477, %v490
    %vm665 = vcmp.eq.s32.totalorder %v478, %v490
    %vm666 = vcmp.eq.s32.totalorder %v479, %v490
    %vm667 = vcmp.eq.s32.totalorder %v480, %v490
    %vm668 = vcmp.eq.s32.totalorder %v481, %v490
    %vm669 = vcmp.eq.s32.totalorder %v482, %v490
    %vm670 = vcmp.eq.s32.totalorder %v483, %v490
    %vm671 = vcmp.eq.s32.totalorder %v484, %v490
    %vm672 = vcmp.eq.s32.totalorder %v485, %v490
    %v673 = vsel %vm657, 0.0, %v435
    %v674 = vsel %vm658, 0.0, %v436
    %v675 = vsel %vm659, 0.0, %v437
    %v676 = vsel %vm660, 0.0, %v438
    %v677 = vsel %vm661, 0.0, %v439
    %v678 = vsel %vm662, 0.0, %v440
    %v679 = vsel %vm663, 0.0, %v441
    %v680 = vsel %vm664, 0.0, %v442
    %v681 = vsel %vm665, 0.0, %v443
    %v682 = vsel %vm666, 0.0, %v444
    %v683 = vsel %vm667, 0.0, %v445
    %v684 = vsel %vm668, 0.0, %v446
    %v685 = vsel %vm669, 0.0, %v447
    %v686 = vsel %vm670, 0.0, %v448
    %v687 = vsel %vm671, 0.0, %v449
    %v688 = vsel %vm672, 0.0, %v450
    %v689 = vrsqrt.pop %v673
    %v690 = vmul.f32 %v673, %v689
    %vm691 = vcmp.eq.f32.partialorder %v673, inf
    %v692 = vsel %vm691, %v673, %v690
    %vm693 = vcmp.eq.f32.partialorder %v673, 0.0
    %v694 = vand.u32 %v673, 2147483648
    %v695 = vsel %vm693, %v694, %v692
    %v696 = vrsqrt.pop %v674
    %v697 = vmul.f32 %v674, %v696
    %vm698 = vcmp.eq.f32.partialorder %v674, inf
    %v699 = vsel %vm698, %v674, %v697
    %vm700 = vcmp.eq.f32.partialorder %v674, 0.0
    %v701 = vand.u32 %v674, 2147483648
    %v702 = vsel %vm700, %v701, %v699
    %v703 = vrsqrt.pop %v675
    %v704 = vmul.f32 %v675, %v703
    %vm705 = vcmp.eq.f32.partialorder %v675, inf
    %v706 = vsel %vm705, %v675, %v704
    %vm707 = vcmp.eq.f32.partialorder %v675, 0.0
    %v708 = vand.u32 %v675, 2147483648
    %v709 = vsel %vm707, %v708, %v706
    %v710 = vrsqrt.pop %v676
    %v711 = vmul.f32 %v676, %v710
    %vm712 = vcmp.eq.f32.partialorder %v676, inf
    %v713 = vsel %vm712, %v676, %v711
    %vm714 = vcmp.eq.f32.partialorder %v676, 0.0
    %v715 = vand.u32 %v676, 2147483648
    %v716 = vsel %vm714, %v715, %v713
    %v717 = vrsqrt.pop %v677
    %v718 = vmul.f32 %v677, %v717
    %vm719 = vcmp.eq.f32.partialorder %v677, inf
    %v720 = vsel %vm719, %v677, %v718
    %vm721 = vcmp.eq.f32.partialorder %v677, 0.0
    %v722 = vand.u32 %v677, 2147483648
    %v723 = vsel %vm721, %v722, %v720
    %v724 = vrsqrt.pop %v678
    %v725 = vmul.f32 %v678, %v724
    %vm726 = vcmp.eq.f32.partialorder %v678, inf
    %v727 = vsel %vm726, %v678, %v725
    %vm728 = vcmp.eq.f32.partialorder %v678, 0.0
    %v729 = vand.u32 %v678, 2147483648
    %v730 = vsel %vm728, %v729, %v727
    %v731 = vrsqrt.pop %v679
    %v732 = vmul.f32 %v679, %v731
    %vm733 = vcmp.eq.f32.partialorder %v679, inf
    %v734 = vsel %vm733, %v679, %v732
    %vm735 = vcmp.eq.f32.partialorder %v679, 0.0
    %v736 = vand.u32 %v679, 2147483648
    %v737 = vsel %vm735, %v736, %v734
    %v738 = vrsqrt.pop %v680
    %v739 = vmul.f32 %v680, %v738
    %vm740 = vcmp.eq.f32.partialorder %v680, inf
    %v741 = vsel %vm740, %v680, %v739
    %vm742 = vcmp.eq.f32.partialorder %v680, 0.0
    %v743 = vand.u32 %v680, 2147483648
    %v744 = vsel %vm742, %v743, %v741
    %v745 = vrsqrt.pop %v681
    %v746 = vmul.f32 %v681, %v745
    %vm747 = vcmp.eq.f32.partialorder %v681, inf
    %v748 = vsel %vm747, %v681, %v746
    %vm749 = vcmp.eq.f32.partialorder %v681, 0.0
    %v750 = vand.u32 %v681, 2147483648
    %v751 = vsel %vm749, %v750, %v748
    %v752 = vrsqrt.pop %v682
    %v753 = vmul.f32 %v682, %v752
    %vm754 = vcmp.eq.f32.partialorder %v682, inf
    %v755 = vsel %vm754, %v682, %v753
    %vm756 = vcmp.eq.f32.partialorder %v682, 0.0
    %v757 = vand.u32 %v682, 2147483648
    %v758 = vsel %vm756, %v757, %v755
    %v759 = vrsqrt.pop %v683
    %v760 = vmul.f32 %v683, %v759
    %vm761 = vcmp.eq.f32.partialorder %v683, inf
    %v762 = vsel %vm761, %v683, %v760
    %vm763 = vcmp.eq.f32.partialorder %v683, 0.0
    %v764 = vand.u32 %v683, 2147483648
    %v765 = vsel %vm763, %v764, %v762
    %v766 = vrsqrt.pop %v684
    %v767 = vmul.f32 %v684, %v766
    %vm768 = vcmp.eq.f32.partialorder %v684, inf
    %v769 = vsel %vm768, %v684, %v767
    %vm770 = vcmp.eq.f32.partialorder %v684, 0.0
    %v771 = vand.u32 %v684, 2147483648
    %v772 = vsel %vm770, %v771, %v769
    %v773 = vrsqrt.pop %v685
    %v774 = vmul.f32 %v685, %v773
    %vm775 = vcmp.eq.f32.partialorder %v685, inf
    %v776 = vsel %vm775, %v685, %v774
    %vm777 = vcmp.eq.f32.partialorder %v685, 0.0
    %v778 = vand.u32 %v685, 2147483648
    %v779 = vsel %vm777, %v778, %v776
    %v780 = vrsqrt.pop %v686
    %v781 = vmul.f32 %v686, %v780
    %vm782 = vcmp.eq.f32.partialorder %v686, inf
    %v783 = vsel %vm782, %v686, %v781
    %vm784 = vcmp.eq.f32.partialorder %v686, 0.0
    %v785 = vand.u32 %v686, 2147483648
    %v786 = vsel %vm784, %v785, %v783
    %v787 = vrsqrt.pop %v687
    %v788 = vmul.f32 %v687, %v787
    %vm789 = vcmp.eq.f32.partialorder %v687, inf
    %v790 = vsel %vm789, %v687, %v788
    %vm791 = vcmp.eq.f32.partialorder %v687, 0.0
    %v792 = vand.u32 %v687, 2147483648
    %v793 = vsel %vm791, %v792, %v790
    %v794 = vrsqrt.pop %v688
    %v795 = vmul.f32 %v688, %v794
    %vm796 = vcmp.eq.f32.partialorder %v688, inf
    %v797 = vsel %vm796, %v688, %v795
    %vm798 = vcmp.eq.f32.partialorder %v688, 0.0
    %v799 = vand.u32 %v688, 2147483648
    %v800 = vsel %vm798, %v799, %v797
    %v801 = vsel %vm609, %v695, 0.0
    %v802 = vsel %vm610, %v702, 0.0
    %v803 = vsel %vm611, %v709, 0.0
    %v804 = vsel %vm612, %v716, 0.0
    %v805 = vsel %vm613, %v723, 0.0
    %v806 = vsel %vm614, %v730, 0.0
    %v807 = vsel %vm615, %v737, 0.0
    %v808 = vsel %vm616, %v744, 0.0
    %v809 = vsel %vm617, %v751, 0.0
    %v810 = vsel %vm618, %v758, 0.0
    %v811 = vsel %vm619, %v765, 0.0
    %v812 = vsel %vm620, %v772, 0.0
    %v813 = vsel %vm621, %v779, 0.0
    %v814 = vsel %vm622, %v786, 0.0
    %v815 = vsel %vm623, %v793, 0.0
    %v816 = vsel %vm624, %v800, 0.0
    %v817 = vadd.f32 %v801, %v802
    %v818 = vadd.f32 %v817, %v803
    %v819 = vadd.f32 %v818, %v804
    %v820 = vadd.f32 %v819, %v805
    %v821 = vadd.f32 %v820, %v806
    %v822 = vadd.f32 %v821, %v807
    %v823 = vadd.f32 %v822, %v808
    %v824 = vadd.f32 %v823, %v809
    %v825 = vadd.f32 %v824, %v810
    %v826 = vadd.f32 %v825, %v811
    %v827 = vadd.f32 %v826, %v812
    %v828 = vadd.f32 %v827, %v813
    %v829 = vadd.f32 %v828, %v814
    %v830 = vadd.f32 %v829, %v815
    %v831 = vadd.f32 %v830, %v816
    %832 = vadd.xlane.f32.xlu0 %v831
    %v833 = vpop.xlane.xlu0 %832
    %v834 = vrot.slane %v833, 4
    %v835 = vadd.f32 %v833, %v834
    %v836 = vrot.slane %v835, 2
    %v837 = vadd.f32 %v835, %v836
    %v838 = vrot.slane %v837, 1
    %v839 = vadd.f32 %v837, %v838
    %s840 = vtos %v839
    %v841 = vsel %vm609, 1.0, 0.0
    %v842 = vsel %vm610, 1.0, 0.0
    %v843 = vsel %vm611, 1.0, 0.0
    %v844 = vsel %vm612, 1.0, 0.0
    %v845 = vsel %vm613, 1.0, 0.0
    %v846 = vsel %vm614, 1.0, 0.0
    %v847 = vsel %vm615, 1.0, 0.0
    %v848 = vsel %vm616, 1.0, 0.0
    %v849 = vsel %vm617, 1.0, 0.0
    %v850 = vsel %vm618, 1.0, 0.0
    %v851 = vsel %vm619, 1.0, 0.0
    %v852 = vsel %vm620, 1.0, 0.0
    %v853 = vsel %vm621, 1.0, 0.0
    %v854 = vsel %vm622, 1.0, 0.0
    %v855 = vsel %vm623, 1.0, 0.0
    %v856 = vsel %vm624, 1.0, 0.0
    %v857 = vadd.f32 %v841, %v842
    %v858 = vadd.f32 %v857, %v843
    %v859 = vadd.f32 %v858, %v844
    %v860 = vadd.f32 %v859, %v845
    %v861 = vadd.f32 %v860, %v846
    %v862 = vadd.f32 %v861, %v847
    %v863 = vadd.f32 %v862, %v848
    %v864 = vadd.f32 %v863, %v849
    %v865 = vadd.f32 %v864, %v850
    %v866 = vadd.f32 %v865, %v851
    %v867 = vadd.f32 %v866, %v852
    %v868 = vadd.f32 %v867, %v853
    %v869 = vadd.f32 %v868, %v854
    %v870 = vadd.f32 %v869, %v855
    %v871 = vadd.f32 %v870, %v856
    %872 = vadd.xlane.f32.xlu0 %v871
    %v873 = vpop.xlane.xlu0 %872
    %v874 = vrot.slane %v873, 4
    %v875 = vadd.f32 %v873, %v874
    %v876 = vrot.slane %v875, 2
    %v877 = vadd.f32 %v875, %v876
    %v878 = vrot.slane %v877, 1
    %v879 = vadd.f32 %v877, %v878
    %s880 = vtos %v879
    %v881 = vsub.f32 0.0, %v695
    %v882 = vsub.f32 0.0, %v702
    %v883 = vsub.f32 0.0, %v709
    %v884 = vsub.f32 0.0, %v716
    %v885 = vsub.f32 0.0, %v723
    %v886 = vsub.f32 0.0, %v730
    %v887 = vsub.f32 0.0, %v737
    %v888 = vsub.f32 0.0, %v744
    %v889 = vsub.f32 0.0, %v751
    %v890 = vsub.f32 0.0, %v758
    %v891 = vsub.f32 0.0, %v765
    %v892 = vsub.f32 0.0, %v772
    %v893 = vsub.f32 0.0, %v779
    %v894 = vsub.f32 0.0, %v786
    %v895 = vsub.f32 0.0, %v793
    %v896 = vsub.f32 0.0, %v800
    %v897 = vmul.f32 %v881, 1.442695
    %v898 = vpow.pop %v897
    %v899 = vmul.f32 %v882, 1.442695
    %v900 = vpow.pop %v899
    %v901 = vmul.f32 %v883, 1.442695
    %v902 = vpow.pop %v901
    %v903 = vmul.f32 %v884, 1.442695
    %v904 = vpow.pop %v903
    %v905 = vmul.f32 %v885, 1.442695
    %v906 = vpow.pop %v905
    %v907 = vmul.f32 %v886, 1.442695
    %v908 = vpow.pop %v907
    %v909 = vmul.f32 %v887, 1.442695
    %v910 = vpow.pop %v909
    %v911 = vmul.f32 %v888, 1.442695
    %v912 = vpow.pop %v911
    %v913 = vmul.f32 %v889, 1.442695
    %v914 = vpow.pop %v913
    %v915 = vmul.f32 %v890, 1.442695
    %v916 = vpow.pop %v915
    %v917 = vmul.f32 %v891, 1.442695
    %v918 = vpow.pop %v917
    %v919 = vmul.f32 %v892, 1.442695
    %v920 = vpow.pop %v919
    %v921 = vmul.f32 %v893, 1.442695
    %v922 = vpow.pop %v921
    %v923 = vmul.f32 %v894, 1.442695
    %v924 = vpow.pop %v923
    %v925 = vmul.f32 %v895, 1.442695
    %v926 = vpow.pop %v925
    %v927 = vmul.f32 %v896, 1.442695
    %v928 = vpow.pop %v927
    %v929 = vadd.f32 %v898, 1.0
    %v930 = vlog2.pop %v929
    %v931 = vmul.f32 %v930, 0.6931472
    %v932 = vmul.f32 -0.5, %v898
    %v933 = vadd.f32 %v932, 1.0
    %v934 = vmul.f32 %v933, %v898
    %v935 = vand.u32 2147483647, %v898
    %vm936 = vcmp.lt.f32.partialorder %v935, 0.0004427343
    %v937 = vsel %vm936, %v934, %v931
    %v938 = vadd.f32 %v900, 1.0
    %v939 = vlog2.pop %v938
    %v940 = vmul.f32 %v939, 0.6931472
    %v941 = vmul.f32 -0.5, %v900
    %v942 = vadd.f32 %v941, 1.0
    %v943 = vmul.f32 %v942, %v900
    %v944 = vand.u32 2147483647, %v900
    %vm945 = vcmp.lt.f32.partialorder %v944, 0.0004427343
    %v946 = vsel %vm945, %v943, %v940
    %v947 = vadd.f32 %v902, 1.0
    %v948 = vlog2.pop %v947
    %v949 = vmul.f32 %v948, 0.6931472
    %v950 = vmul.f32 -0.5, %v902
    %v951 = vadd.f32 %v950, 1.0
    %v952 = vmul.f32 %v951, %v902
    %v953 = vand.u32 2147483647, %v902
    %vm954 = vcmp.lt.f32.partialorder %v953, 0.0004427343
    %v955 = vsel %vm954, %v952, %v949
    %v956 = vadd.f32 %v904, 1.0
    %v957 = vlog2.pop %v956
    %v958 = vmul.f32 %v957, 0.6931472
    %v959 = vmul.f32 -0.5, %v904
    %v960 = vadd.f32 %v959, 1.0
    %v961 = vmul.f32 %v960, %v904
    %v962 = vand.u32 2147483647, %v904
    %vm963 = vcmp.lt.f32.partialorder %v962, 0.0004427343
    %v964 = vsel %vm963, %v961, %v958
    %v965 = vadd.f32 %v906, 1.0
    %v966 = vlog2.pop %v965
    %v967 = vmul.f32 %v966, 0.6931472
    %v968 = vmul.f32 -0.5, %v906
    %v969 = vadd.f32 %v968, 1.0
    %v970 = vmul.f32 %v969, %v906
    %v971 = vand.u32 2147483647, %v906
    %vm972 = vcmp.lt.f32.partialorder %v971, 0.0004427343
    %v973 = vsel %vm972, %v970, %v967
    %v974 = vadd.f32 %v908, 1.0
    %v975 = vlog2.pop %v974
    %v976 = vmul.f32 %v975, 0.6931472
    %v977 = vmul.f32 -0.5, %v908
    %v978 = vadd.f32 %v977, 1.0
    %v979 = vmul.f32 %v978, %v908
    %v980 = vand.u32 2147483647, %v908
    %vm981 = vcmp.lt.f32.partialorder %v980, 0.0004427343
    %v982 = vsel %vm981, %v979, %v976
    %v983 = vadd.f32 %v910, 1.0
    %v984 = vlog2.pop %v983
    %v985 = vmul.f32 %v984, 0.6931472
    %v986 = vmul.f32 -0.5, %v910
    %v987 = vadd.f32 %v986, 1.0
    %v988 = vmul.f32 %v987, %v910
    %v989 = vand.u32 2147483647, %v910
    %vm990 = vcmp.lt.f32.partialorder %v989, 0.0004427343
    %v991 = vsel %vm990, %v988, %v985
    %v992 = vadd.f32 %v912, 1.0
    %v993 = vlog2.pop %v992
    %v994 = vmul.f32 %v993, 0.6931472
    %v995 = vmul.f32 -0.5, %v912
    %v996 = vadd.f32 %v995, 1.0
    %v997 = vmul.f32 %v996, %v912
    %v998 = vand.u32 2147483647, %v912
    %vm999 = vcmp.lt.f32.partialorder %v998, 0.0004427343
    %v1000 = vsel %vm999, %v997, %v994
    %v1001 = vadd.f32 %v914, 1.0
    %v1002 = vlog2.pop %v1001
    %v1003 = vmul.f32 %v1002, 0.6931472
    %v1004 = vmul.f32 -0.5, %v914
    %v1005 = vadd.f32 %v1004, 1.0
    %v1006 = vmul.f32 %v1005, %v914
    %v1007 = vand.u32 2147483647, %v914
    %vm1008 = vcmp.lt.f32.partialorder %v1007, 0.0004427343
    %v1009 = vsel %vm1008, %v1006, %v1003
    %v1010 = vadd.f32 %v916, 1.0
    %v1011 = vlog2.pop %v1010
    %v1012 = vmul.f32 %v1011, 0.6931472
    %v1013 = vmul.f32 -0.5, %v916
    %v1014 = vadd.f32 %v1013, 1.0
    %v1015 = vmul.f32 %v1014, %v916
    %v1016 = vand.u32 2147483647, %v916
    %vm1017 = vcmp.lt.f32.partialorder %v1016, 0.0004427343
    %v1018 = vsel %vm1017, %v1015, %v1012
    %v1019 = vadd.f32 %v918, 1.0
    %v1020 = vlog2.pop %v1019
    %v1021 = vmul.f32 %v1020, 0.6931472
    %v1022 = vmul.f32 -0.5, %v918
    %v1023 = vadd.f32 %v1022, 1.0
    %v1024 = vmul.f32 %v1023, %v918
    %v1025 = vand.u32 2147483647, %v918
    %vm1026 = vcmp.lt.f32.partialorder %v1025, 0.0004427343
    %v1027 = vsel %vm1026, %v1024, %v1021
    %v1028 = vadd.f32 %v920, 1.0
    %v1029 = vlog2.pop %v1028
    %v1030 = vmul.f32 %v1029, 0.6931472
    %v1031 = vmul.f32 -0.5, %v920
    %v1032 = vadd.f32 %v1031, 1.0
    %v1033 = vmul.f32 %v1032, %v920
    %v1034 = vand.u32 2147483647, %v920
    %vm1035 = vcmp.lt.f32.partialorder %v1034, 0.0004427343
    %v1036 = vsel %vm1035, %v1033, %v1030
    %v1037 = vadd.f32 %v922, 1.0
    %v1038 = vlog2.pop %v1037
    %v1039 = vmul.f32 %v1038, 0.6931472
    %v1040 = vmul.f32 -0.5, %v922
    %v1041 = vadd.f32 %v1040, 1.0
    %v1042 = vmul.f32 %v1041, %v922
    %v1043 = vand.u32 2147483647, %v922
    %vm1044 = vcmp.lt.f32.partialorder %v1043, 0.0004427343
    %v1045 = vsel %vm1044, %v1042, %v1039
    %v1046 = vadd.f32 %v924, 1.0
    %v1047 = vlog2.pop %v1046
    %v1048 = vmul.f32 %v1047, 0.6931472
    %v1049 = vmul.f32 -0.5, %v924
    %v1050 = vadd.f32 %v1049, 1.0
    %v1051 = vmul.f32 %v1050, %v924
    %v1052 = vand.u32 2147483647, %v924
    %vm1053 = vcmp.lt.f32.partialorder %v1052, 0.0004427343
    %v1054 = vsel %vm1053, %v1051, %v1048
    %v1055 = vadd.f32 %v926, 1.0
    %v1056 = vlog2.pop %v1055
    %v1057 = vmul.f32 %v1056, 0.6931472
    %v1058 = vmul.f32 -0.5, %v926
    %v1059 = vadd.f32 %v1058, 1.0
    %v1060 = vmul.f32 %v1059, %v926
    %v1061 = vand.u32 2147483647, %v926
    %vm1062 = vcmp.lt.f32.partialorder %v1061, 0.0004427343
    %v1063 = vsel %vm1062, %v1060, %v1057
    %v1064 = vadd.f32 %v928, 1.0
    %v1065 = vlog2.pop %v1064
    %v1066 = vmul.f32 %v1065, 0.6931472
    %v1067 = vmul.f32 -0.5, %v928
    %v1068 = vadd.f32 %v1067, 1.0
    %v1069 = vmul.f32 %v1068, %v928
    %v1070 = vand.u32 2147483647, %v928
    %vm1071 = vcmp.lt.f32.partialorder %v1070, 0.0004427343
    %v1072 = vsel %vm1071, %v1069, %v1066
    %v1073 = vsel %vm641, %v937, 0.0
    %v1074 = vsel %vm642, %v946, 0.0
    %v1075 = vsel %vm643, %v955, 0.0
    %v1076 = vsel %vm644, %v964, 0.0
    %v1077 = vsel %vm645, %v973, 0.0
    %v1078 = vsel %vm646, %v982, 0.0
    %v1079 = vsel %vm647, %v991, 0.0
    %v1080 = vsel %vm648, %v1000, 0.0
    %v1081 = vsel %vm649, %v1009, 0.0
    %v1082 = vsel %vm650, %v1018, 0.0
    %v1083 = vsel %vm651, %v1027, 0.0
    %v1084 = vsel %vm652, %v1036, 0.0
    %v1085 = vsel %vm653, %v1045, 0.0
    %v1086 = vsel %vm654, %v1054, 0.0
    %v1087 = vsel %vm655, %v1063, 0.0
    %v1088 = vsel %vm656, %v1072, 0.0
    %v1089 = vadd.f32 %v1073, %v1074
    %v1090 = vadd.f32 %v1089, %v1075
    %v1091 = vadd.f32 %v1090, %v1076
    %v1092 = vadd.f32 %v1091, %v1077
    %v1093 = vadd.f32 %v1092, %v1078
    %v1094 = vadd.f32 %v1093, %v1079
    %v1095 = vadd.f32 %v1094, %v1080
    %v1096 = vadd.f32 %v1095, %v1081
    %v1097 = vadd.f32 %v1096, %v1082
    %v1098 = vadd.f32 %v1097, %v1083
    %v1099 = vadd.f32 %v1098, %v1084
    %v1100 = vadd.f32 %v1099, %v1085
    %v1101 = vadd.f32 %v1100, %v1086
    %v1102 = vadd.f32 %v1101, %v1087
    %v1103 = vadd.f32 %v1102, %v1088
    %1104 = vadd.xlane.f32.xlu0 %v1103
    %v1105 = vpop.xlane.xlu0 %1104
    %v1106 = vrot.slane %v1105, 4
    %v1107 = vadd.f32 %v1105, %v1106
    %v1108 = vrot.slane %v1107, 2
    %v1109 = vadd.f32 %v1107, %v1108
    %v1110 = vrot.slane %v1109, 1
    %v1111 = vadd.f32 %v1109, %v1110
    %s1112 = vtos %v1111
    %vm1113 = vcmp.eq.s32.totalorder %v488, 0
    %vm1114 = vcmp.eq.s32.totalorder %v488, 1
    %vm1115 = vcmp.eq.s32.totalorder %v488, 2
    %v1116 = vstv %s1112
    %v1117 = vsel %vm1115, %v1116, 0.0
    %v1118 = vstv %s880
    %v1119 = vsel %vm1114, %v1118, %v1117
    %v1120 = vstv %s840
    %v1121 = vsel %vm1113, %v1120, %v1119
    %v1122 = vld [vmem:[#allocation13] sm:$0x1]
    %v1123 = vadd.f32 %v1122, %v1121
    %1124 = vst [vmem:[#allocation13] sm:$0x1] %v1123
    // Predicated region
    $region54: #{tpu_custom_call.1} parent=1 // pred_check
      _
    $region55: #{tpu_custom_call.1} parent=1 // pred_check_branch
      %1126 = sbr.rel (0) target = $region57
    $region56: #{tpu_custom_call.1} parent=1 // pred_region
      %s1128 = ssub.s32 16, 16
      %1129 = vsyncadd [#allocation4], %s1128
      %s1131 = sshll.u32 [#allocation13], 4
      %s1132 = int_to_ptr.vmem [resolvable:$true] %s1131
      %1134 = dma.vmem_to_hbm [thread:$0]  %s1132, 16, %s6, [#allocation4]
    $region57: #{tpu_custom_call.1} parent=1 // pred_fallthru
      _
    // Predicated region
    $region58: #{tpu_custom_call.1} parent=1 // pred_check
      _
    $region59: #{tpu_custom_call.1} parent=1 // pred_check_branch
      %1136 = sbr.rel (0) target = $region61
    $region60: #{tpu_custom_call.1} parent=1 // pred_region
      %1137 = dma.done [#allocation4], 16
    $region61: #{tpu_custom_call.1} parent=1 // pred_fallthru
      _
    %1138 = vsyncpa [#allocation3], 1
    %1139 = vsyncpa [#allocation6], 1
    %1140 = vsyncpa [#allocation9], 1
    %1141 = vsyncpa [#allocation12], 1
    %1142 = vsyncpa [#allocation4], 1

</llo_original>
